<compile_context>
chip_gen: v7x
topology: tpu7x:2x2x1
jax: 0.10.0
libtpu: 0.0.40
codegen_flags: <defaults>
</compile_context>

<pallas_src>
import math
import functools

import jax
import jax.numpy as jnp
from jax.experimental import pallas as pl
from jax.experimental.pallas import tpu as pltpu

HIDDEN = 16
DROP_P = 0.5   # torch.nn.Dropout(0.5); module is in training mode by default


def _attn_dropout_kernel(q_ref, kv_ref, bits_ref, o_ref, *, scale, drop_p):
    q = q_ref[...].astype(jnp.float32)    # (B, Sq, D)
    kv = kv_ref[...].astype(jnp.float32)  # (B, Sk, D)

    # qk[b,q,k] = sum_d x1[b,q,d] * x2[b,k,d]  (== x1 @ x2^T, no explicit .T)
    qk = jnp.einsum("bqd,bkd->bqk", q, kv,
                    preferred_element_type=jnp.float32) * scale   # (B, Sq, Sk)

    # numerically-stable softmax along the last axis
    m = jnp.max(qk, axis=-1, keepdims=True)
    e = jnp.exp(qk - m)
    denom = jnp.sum(e, axis=-1, keepdims=True)

    # dropout(p): drop iff bits < p * 2^32  (threshold on full 32-bit word)
    bits = bits_ref[...]
    threshold = jnp.uint32(int(drop_p * 4294967296.0))
    keep = bits >= threshold

    # fold softmax normalization and dropout survivor scaling into one factor
    inv = pl.reciprocal(denom, approx=True) * (1.0 / (1.0 - drop_p))
    p = jnp.where(keep, e * inv, jnp.float32(0.0))                # (B, Sq, Sk)

    # output = dropout_qk @ x2
    out = jnp.einsum("bqk,bkd->bqd", p, kv,
                     preferred_element_type=jnp.float32)          # (B, Sq, D)
    o_ref[...] = out.astype(o_ref.dtype)


def model_forward(x1, x2, key):
    """Pallas implementation of Model.forward (training-mode dropout)."""
    B, Sq, D = x1.shape
    B2, Sk, D2 = x2.shape
    assert B == B2 and D == D2

    scale = 1.0 / math.sqrt(D)

    # Dropout randomness generated host-side (TPU stateful PRNG primitives
    # have no CPU-interpret lowering). The mask itself is applied in-kernel.
    bits = jax.random.bits(key, (B, Sq, Sk), dtype=jnp.uint32)

    kernel = functools.partial(_attn_dropout_kernel, scale=scale, drop_p=DROP_P)

    return pl.pallas_call(
        kernel,
        out_shape=jax.ShapeDtypeStruct((B, Sq, D), x1.dtype),
        grid=(1,),  # single invocation: whole problem fits trivially in VMEM
        in_specs=[
            pl.BlockSpec((B, Sq, D), lambda i: (0, 0, 0)),
            pl.BlockSpec((B, Sk, D), lambda i: (0, 0, 0)),
            pl.BlockSpec((B, Sq, Sk), lambda i: (0, 0, 0)),
        ],
        out_specs=pl.BlockSpec((B, Sq, D), lambda i: (0, 0, 0)),
        compiler_params=pltpu.CompilerParams(
            dimension_semantics=("arbitrary",),
        ),
    )(x1, x2, bits)


if __name__ == "__main__":
    key = jax.random.PRNGKey(0)
    k1, k2, kd = jax.random.split(key, 3)

    # small shapes consistent with the module: (batch, seq, hidden=16)
    B, Sq, Sk, D = 4, 8, 8, HIDDEN
    x1 = jax.random.normal(k1, (B, Sq, D), dtype=jnp.float32)
    x2 = jax.random.normal(k2, (B, Sk, D), dtype=jnp.float32)

    out = model_forward(x1, x2, kd)
    jax.block_until_ready(out)

    assert out.shape == (B, Sq, D)
    assert bool(jnp.all(jnp.isfinite(out)))
    print("KERNEL_OK")
</pallas_src>

<mosaic_0001>
module attributes {stable_mosaic.version = 11 : i64} {
  func.func @_attn_dropout_kernel(%arg0: i32, %arg1: memref<4x8x16xf32, #tpu.memory_space<vmem>>, %arg2: memref<4x8x16xf32, #tpu.memory_space<vmem>>, %arg3: memref<4x8x8xi32, #tpu.memory_space<vmem>>, %arg4: memref<4x8x16xf32, #tpu.memory_space<vmem>>) attributes {dimension_semantics = [#tpu.dimension_semantics<arbitrary>], iteration_bounds = array<i64: 1>, scalar_prefetch = 0 : i64, scratch_operands = 0 : i64, tpu.core_type = #tpu.core_type<tc>, window_params = [{pipeline_mode = #tpu.pipeline_mode<synchronous>, transform_indices = @transform_0, window_bounds = array<i64: 4, 8, 16>}, {pipeline_mode = #tpu.pipeline_mode<synchronous>, transform_indices = @transform_1, window_bounds = array<i64: 4, 8, 16>}, {pipeline_mode = #tpu.pipeline_mode<synchronous>, transform_indices = @transform_2, window_bounds = array<i64: 4, 8, 8>}, {pipeline_mode = #tpu.pipeline_mode<synchronous>, transform_indices = @transform_3, window_bounds = array<i64: 4, 8, 16>}]} {
    %c0 = arith.constant 0 : index
    %c0_0 = arith.constant 0 : index
    %c0_1 = arith.constant 0 : index
    %0 = vector.load %arg1[%c0, %c0_0, %c0_1] : memref<4x8x16xf32, #tpu.memory_space<vmem>>, vector<4x8x16xf32>
    %c0_2 = arith.constant 0 : index
    %c0_3 = arith.constant 0 : index
    %c0_4 = arith.constant 0 : index
    %1 = vector.load %arg2[%c0_2, %c0_3, %c0_4] : memref<4x8x16xf32, #tpu.memory_space<vmem>>, vector<4x8x16xf32>
    "tpu.trace_start"() <{level = 10 : i32, message = "bqd,bkd->bqk"}> : () -> ()
    %cst = arith.constant dense<0.000000e+00> : vector<4x8x8xf32>
    %2 = tpu.matmul %0, %1, %cst {dimension_numbers = #tpu.dot_dimension_numbers<[2], [2], [1], [1], [0, 0, 0, 1, 1, 1], [0], [0]>} : vector<4x8x16xf32>, vector<4x8x16xf32>, vector<4x8x8xf32> -> vector<4x8x8xf32>
    "tpu.trace_stop"() : () -> ()
    %cst_5 = arith.constant 2.500000e-01 : f32
    %3 = vector.broadcast %cst_5 : f32 to vector<4x8x8xf32>
    %4 = arith.mulf %2, %3 : vector<4x8x8xf32>
    %cst_6 = arith.constant dense<0xFF800000> : vector<4x8xf32>
    %5 = vector.multi_reduction <maximumf>, %4, %cst_6 [2] : vector<4x8x8xf32> to vector<4x8xf32>
    %6 = vector.shape_cast %5 : vector<4x8xf32> to vector<4x8x1xf32>
    %7 = vector.broadcast %6 : vector<4x8x1xf32> to vector<4x8x8xf32>
    %8 = arith.subf %4, %7 : vector<4x8x8xf32>
    %9 = math.exp %8 : vector<4x8x8xf32>
    %cst_7 = arith.constant dense<0.000000e+00> : vector<4x8xf32>
    %10 = vector.multi_reduction <add>, %9, %cst_7 [2] : vector<4x8x8xf32> to vector<4x8xf32>
    %11 = vector.shape_cast %10 : vector<4x8xf32> to vector<4x8x1xf32>
    %c0_8 = arith.constant 0 : index
    %c0_9 = arith.constant 0 : index
    %c0_10 = arith.constant 0 : index
    %12 = vector.load %arg3[%c0_8, %c0_9, %c0_10] : memref<4x8x8xi32, #tpu.memory_space<vmem>>, vector<4x8x8xi32>
    %c-2147483648_i32 = arith.constant -2147483648 : i32
    %13 = vector.broadcast %c-2147483648_i32 : i32 to vector<4x8x8xi32>
    %14 = arith.cmpi uge, %12, %13 : vector<4x8x8xi32>
    %15 = tpu.reciprocal %11 {approx = true} : vector<4x8x1xf32> -> vector<4x8x1xf32>
    %cst_11 = arith.constant 2.000000e+00 : f32
    %16 = vector.broadcast %cst_11 : f32 to vector<4x8x1xf32>
    %17 = arith.mulf %15, %16 : vector<4x8x1xf32>
    %18 = vector.broadcast %17 : vector<4x8x1xf32> to vector<4x8x8xf32>
    %19 = arith.mulf %9, %18 : vector<4x8x8xf32>
    %cst_12 = arith.constant 0.000000e+00 : f32
    %20 = vector.broadcast %cst_12 : f32 to vector<4x8x8xf32>
    %21 = arith.select %14, %19, %20 : vector<4x8x8xi1>, vector<4x8x8xf32>
    "tpu.trace_start"() <{level = 10 : i32, message = "bqk,bkd->bqd"}> : () -> ()
    %cst_13 = arith.constant dense<0.000000e+00> : vector<4x8x16xf32>
    %22 = tpu.matmul %21, %1, %cst_13 {dimension_numbers = #tpu.dot_dimension_numbers<[2], [1], [1], [2], [0, 0, 0, 1, 1, 2], [0], [0]>} : vector<4x8x8xf32>, vector<4x8x16xf32>, vector<4x8x16xf32> -> vector<4x8x16xf32>
    "tpu.trace_stop"() : () -> ()
    %c0_14 = arith.constant 0 : index
    %c0_15 = arith.constant 0 : index
    %c0_16 = arith.constant 0 : index
    %23 = vector.load %arg4[%c0_14, %c0_15, %c0_16] : memref<4x8x16xf32, #tpu.memory_space<vmem>>, vector<4x8x16xf32>
    tpu.vector_store %arg4[%c0_14, %c0_15, %c0_16], %22 {strides = array<i32>} : memref<4x8x16xf32, #tpu.memory_space<vmem>>, vector<4x8x16xf32>,
    return
  }
  func.func @transform_0(%arg0: i32) -> (i32, i32, i32) {
    %c0_i32 = arith.constant 0 : i32
    %c0_i32_0 = arith.constant 0 : i32
    %c0_i32_1 = arith.constant 0 : i32
    %c0_i32_2 = arith.constant 0 : i32
    return %c0_i32, %c0_i32_0, %c0_i32_1 : i32, i32, i32
  }
  func.func @transform_1(%arg0: i32) -> (i32, i32, i32) {
    %c0_i32 = arith.constant 0 : i32
    %c0_i32_0 = arith.constant 0 : i32
    %c0_i32_1 = arith.constant 0 : i32
    %c0_i32_2 = arith.constant 0 : i32
    return %c0_i32, %c0_i32_0, %c0_i32_1 : i32, i32, i32
  }
  func.func @transform_2(%arg0: i32) -> (i32, i32, i32) {
    %c0_i32 = arith.constant 0 : i32
    %c0_i32_0 = arith.constant 0 : i32
    %c0_i32_1 = arith.constant 0 : i32
    %c0_i32_2 = arith.constant 0 : i32
    return %c0_i32, %c0_i32_0, %c0_i32_1 : i32, i32, i32
  }
  func.func @transform_3(%arg0: i32) -> (i32, i32, i32) {
    %c0_i32 = arith.constant 0 : i32
    %c0_i32_0 = arith.constant 0 : i32
    %c0_i32_1 = arith.constant 0 : i32
    %c0_i32_2 = arith.constant 0 : i32
    return %c0_i32, %c0_i32_0, %c0_i32_1 : i32, i32, i32
  }
}

</mosaic_0001>

<llo_original>
// kernel: tpu_custom_call.1
$region0: #{tpu_custom_call.1}
  #allocation0 [shape = 'u32[]', space=smem, size = 0x4, offset = 0x4, fixed_abs, tag = 'smem constant byte address 0x4 - core index']
  #allocation1 [shape = 'u32[144,128]{1,0:T(1,128)}', space=vmem, size = 0x12000, scoped, tag = 'internal scratch']
  %s0 = inlined_call_operand.hbm [shape: f32[4,8,16], index: 0, kind: input, shape index: {}]
  %s1 = inlined_call_operand.hbm [shape: f32[4,8,16], index: 1, kind: input, shape index: {}]
  %s2 = inlined_call_operand.hbm [shape: u32[4,8,8], index: 2, kind: input, shape index: {}]
  %s3 = inlined_call_operand.hbm [shape: f32[4,8,16], index: 3, kind: output, shape index: {}]
  %s4 = sld [smem:[#allocation0]]
  $region34: #{tpu_custom_call.1} parent=0
    _
  %s6 = ssub.s32 1, %s4
  %s7 = scalar_select 0, %s6, %s4
  $region1: #{tpu_custom_call.1} parent=0
    #allocation2 [shape = 'u8[16384]{0}', space=vmem, size = 0x4000, scoped, tag = 'input window, operand 0, single buffered']
    #allocation3 [shape = 's32[1]{0}', space=sflag, size = 0x4, scoped, tag = 'scoped memory for tpu_custom_call.1']
    #allocation4 [shape = 's32[1]{0}', space=sflag, size = 0x4, scoped, tag = 'scoped memory for tpu_custom_call.1']
    #allocation5 [shape = 'u8[16384]{0}', space=vmem, size = 0x4000, scoped, tag = 'input window, operand 1, single buffered']
    #allocation6 [shape = 's32[1]{0}', space=sflag, size = 0x4, scoped, tag = 'scoped memory for tpu_custom_call.1']
    #allocation7 [shape = 'u8[16384]{0}', space=vmem, size = 0x4000, scoped, tag = 'input window, operand 2, single buffered']
    #allocation8 [shape = 'u8[16384]{0}', space=vmem, size = 0x4000, scoped, tag = 'output window, operand 0, single buffered']
    %8 = vsyncpa [#allocation3], 0
    %9 = vsyncpa [#allocation6], 0
    %10 = vsyncpa [#allocation4], 0
    // Predicated region
    $region2: #{tpu_custom_call.1} parent=1 // pred_check
      _
    $region3: #{tpu_custom_call.1} parent=1 // pred_check_branch
      %12 = sbr.rel (0) target = $region5
    $region4: #{tpu_custom_call.1} parent=1 // pred_region
      %s14 = ssub.s32 512, 512
      %15 = vsyncadd [#allocation3], %s14
      %s16 = sshll.u32 [#allocation2], 4
      %s17 = int_to_ptr.vmem [resolvable:$true] %s16
      %22 = dma.hbm_to_vmem [thread:$0]  %s0, 512, %s17, [#allocation3], 128, 128, 8
    $region5: #{tpu_custom_call.1} parent=1 // pred_fallthru
      _
    // Predicated region
    $region6: #{tpu_custom_call.1} parent=1 // pred_check
      _
    $region7: #{tpu_custom_call.1} parent=1 // pred_check_branch
      %24 = sbr.rel (0) target = $region9
    $region8: #{tpu_custom_call.1} parent=1 // pred_region
      %s26 = ssub.s32 512, 512
      %27 = vsyncadd [#allocation6], %s26
      %s28 = sshll.u32 [#allocation5], 4
      %s29 = int_to_ptr.vmem [resolvable:$true] %s28
      %34 = dma.hbm_to_vmem [thread:$0]  %s1, 512, %s29, [#allocation6], 128, 128, 8
    $region9: #{tpu_custom_call.1} parent=1 // pred_fallthru
      _
    // Predicated region
    $region10: #{tpu_custom_call.1} parent=1 // pred_check
      _
    $region11: #{tpu_custom_call.1} parent=1 // pred_check_branch
      %36 = sbr.rel (0) target = $region13
    $region12: #{tpu_custom_call.1} parent=1 // pred_region
      %s38 = ssub.s32 512, 512
      %39 = vsyncadd [#allocation6], %s38
      %s40 = sshll.u32 [#allocation7], 4
      %s41 = int_to_ptr.vmem [resolvable:$true] %s40
      %46 = dma.hbm_to_vmem [thread:$0]  %s2, 512, %s41, [#allocation6], 128, 128, 8
    $region13: #{tpu_custom_call.1} parent=1 // pred_fallthru
      _
    // Predicated region
    $region14: #{tpu_custom_call.1} parent=1 // pred_check
      _
    $region15: #{tpu_custom_call.1} parent=1 // pred_check_branch
      %48 = sbr.rel (0) target = $region17
    $region16: #{tpu_custom_call.1} parent=1 // pred_region
      %49 = dma.done [#allocation3], 512
    $region17: #{tpu_custom_call.1} parent=1 // pred_fallthru
      _
    // Predicated region
    $region18: #{tpu_custom_call.1} parent=1 // pred_check
      _
    $region19: #{tpu_custom_call.1} parent=1 // pred_check_branch
      %51 = sbr.rel (0) target = $region21
    $region20: #{tpu_custom_call.1} parent=1 // pred_region
      %52 = dma.done [#allocation6], 512
    $region21: #{tpu_custom_call.1} parent=1 // pred_fallthru
      _
    // Predicated region
    $region22: #{tpu_custom_call.1} parent=1 // pred_check
      _
    $region23: #{tpu_custom_call.1} parent=1 // pred_check_branch
      %54 = sbr.rel (0) target = $region25
    $region24: #{tpu_custom_call.1} parent=1 // pred_region
      %55 = dma.done [#allocation6], 512
    $region25: #{tpu_custom_call.1} parent=1 // pred_fallthru
      _
    %v56 = vld [vmem:[#allocation2] sm:$0xff]
    %v57 = vld [vmem:[#allocation2 + $0x8] sm:$0xff]
    %v58 = vld [vmem:[#allocation2 + $0x10] sm:$0xff]
    %v59 = vld [vmem:[#allocation2 + $0x18] sm:$0xff]
    %v60 = vld [vmem:[#allocation5] sm:$0xff]
    %v61 = vld [vmem:[#allocation5 + $0x8] sm:$0xff]
    %v62 = vld [vmem:[#allocation5 + $0x10] sm:$0xff]
    %v63 = vld [vmem:[#allocation5 + $0x18] sm:$0xff]
    %vm64 = vcmask 130048
    %v66 = vsel %vm64, %v56, 0
    %v69 = vsel %vm64, %v60, 0
    %71 = vmatprep.subr.mxu0 0.0
    %72 = vmatpush1.xpose.msra.mxu0 %v69
    %73 = vmatprep.subr.mxu0 0.0
    %74 = vmatpush1.xpose.msra.mxu0 0.0
    %75 = vmatprep.subr.mxu0 0.0
    %76 = vmatpush1.xpose.msra.mxu0 0.0
    %77 = vmatprep.subr.mxu0 0.0
    %78 = vmatpush1.xpose.msra.mxu0 0.0
    %79 = vmatprep.subr.mxu0 0.0
    %80 = vmatpush1.xpose.msra.mxu0 0.0
    %81 = vmatprep.subr.mxu0 0.0
    %82 = vmatpush1.xpose.msra.mxu0 0.0
    %83 = vmatprep.subr.mxu0 0.0
    %84 = vmatpush1.xpose.msra.mxu0 0.0
    %85 = vmatprep.subr.mxu0 0.0
    %86 = vmatpush1.xpose.msra.mxu0 0.0
    %87 = vmatprep.subr.mxu0 0.0
    %88 = vmatpush1.xpose.msra.mxu0 0.0
    %89 = vmatprep.subr.mxu0 0.0
    %90 = vmatpush1.xpose.msra.mxu0 0.0
    %91 = vmatprep.subr.mxu0 0.0
    %92 = vmatpush1.xpose.msra.mxu0 0.0
    %93 = vmatprep.subr.mxu0 0.0
    %94 = vmatpush1.xpose.msra.mxu0 0.0
    %95 = vmatprep.subr.mxu0 0.0
    %96 = vmatpush1.xpose.msra.mxu0 0.0
    %97 = vmatprep.subr.mxu0 0.0
    %98 = vmatpush1.xpose.msra.mxu0 0.0
    %99 = vmatprep.subr.mxu0 0.0
    %100 = vmatpush1.xpose.msra.mxu0 0.0
    %101 = vmatprep.subr.mxu0 0.0
    %102 = vmatpush1.xpose.msra.mxu0 0.0
    %103 = vmatprep.subr.mxu0 0.0
    %104 = vmatpush1.xpose.msra.mxu0 0.0
    %105 = vmatprep.subr.mxu0 0.0
    %106 = vmatpush1.xpose.msra.mxu0 0.0
    %107 = vmatprep.subr.mxu0 0.0
    %108 = vmatpush1.xpose.msra.mxu0 0.0
    %109 = vmatprep.subr.mxu0 0.0
    %110 = vmatpush1.xpose.msra.mxu0 0.0
    %111 = vmatprep.subr.mxu0 0.0
    %112 = vmatpush1.xpose.msra.mxu0 0.0
    %113 = vmatprep.subr.mxu0 0.0
    %114 = vmatpush1.xpose.msra.mxu0 0.0
    %115 = vmatprep.subr.mxu0 0.0
    %116 = vmatpush1.xpose.msra.mxu0 0.0
    %117 = vmatprep.subr.mxu0 0.0
    %118 = vmatpush1.xpose.msra.mxu0 0.0
    %119 = vmatprep.subr.mxu0 0.0
    %120 = vmatpush1.xpose.msra.mxu0 0.0
    %121 = vmatprep.subr.mxu0 0.0
    %122 = vmatpush1.xpose.msra.mxu0 0.0
    %123 = vmatprep.subr.mxu0 0.0
    %124 = vmatpush1.xpose.msra.mxu0 0.0
    %125 = vmatprep.subr.mxu0 0.0
    %126 = vmatpush1.xpose.msra.mxu0 0.0
    %127 = vmatprep.subr.mxu0 0.0
    %128 = vmatpush1.xpose.msra.mxu0 0.0
    %129 = vmatprep.subr.mxu0 0.0
    %130 = vmatpush1.xpose.msra.mxu0 0.0
    %131 = vmatprep.subr.mxu0 0.0
    %132 = vmatpush1.xpose.msra.mxu0 0.0
    %133 = vmatprep.subr.mxu0 0.0
    %134 = vmatpush1.xpose.msra.mxu0 0.0
    %135 = vmatprep.mubr.f32.mxu0 0.0
    %136 = vmatmul.mubr.f32.gmra.mrb[0].mxu0 %v66
    %v137 = vpop.f32.mrb[0].mxu0
    %v138 = vadd.f32 0.0, %v137
    %v139 = vpop.f32.mrb[0].mxu0
    %140 = vdwg.mxu0
    %v142 = vsel %vm64, %v57, 0
    %v145 = vsel %vm64, %v61, 0
    %147 = vmatprep.subr.mxu0 0.0
    %148 = vmatpush1.xpose.msra.mxu0 %v145
    %149 = vmatprep.subr.mxu0 0.0
    %150 = vmatpush1.xpose.msra.mxu0 0.0
    %151 = vmatprep.subr.mxu0 0.0
    %152 = vmatpush1.xpose.msra.mxu0 0.0
    %153 = vmatprep.subr.mxu0 0.0
    %154 = vmatpush1.xpose.msra.mxu0 0.0
    %155 = vmatprep.subr.mxu0 0.0
    %156 = vmatpush1.xpose.msra.mxu0 0.0
    %157 = vmatprep.subr.mxu0 0.0
    %158 = vmatpush1.xpose.msra.mxu0 0.0
    %159 = vmatprep.subr.mxu0 0.0
    %160 = vmatpush1.xpose.msra.mxu0 0.0
    %161 = vmatprep.subr.mxu0 0.0
    %162 = vmatpush1.xpose.msra.mxu0 0.0
    %163 = vmatprep.subr.mxu0 0.0
    %164 = vmatpush1.xpose.msra.mxu0 0.0
    %165 = vmatprep.subr.mxu0 0.0
    %166 = vmatpush1.xpose.msra.mxu0 0.0
    %167 = vmatprep.subr.mxu0 0.0
    %168 = vmatpush1.xpose.msra.mxu0 0.0
    %169 = vmatprep.subr.mxu0 0.0
    %170 = vmatpush1.xpose.msra.mxu0 0.0
    %171 = vmatprep.subr.mxu0 0.0
    %172 = vmatpush1.xpose.msra.mxu0 0.0
    %173 = vmatprep.subr.mxu0 0.0
    %174 = vmatpush1.xpose.msra.mxu0 0.0
    %175 = vmatprep.subr.mxu0 0.0
    %176 = vmatpush1.xpose.msra.mxu0 0.0
    %177 = vmatprep.subr.mxu0 0.0
    %178 = vmatpush1.xpose.msra.mxu0 0.0
    %179 = vmatprep.subr.mxu0 0.0
    %180 = vmatpush1.xpose.msra.mxu0 0.0
    %181 = vmatprep.subr.mxu0 0.0
    %182 = vmatpush1.xpose.msra.mxu0 0.0
    %183 = vmatprep.subr.mxu0 0.0
    %184 = vmatpush1.xpose.msra.mxu0 0.0
    %185 = vmatprep.subr.mxu0 0.0
    %186 = vmatpush1.xpose.msra.mxu0 0.0
    %187 = vmatprep.subr.mxu0 0.0
    %188 = vmatpush1.xpose.msra.mxu0 0.0
    %189 = vmatprep.subr.mxu0 0.0
    %190 = vmatpush1.xpose.msra.mxu0 0.0
    %191 = vmatprep.subr.mxu0 0.0
    %192 = vmatpush1.xpose.msra.mxu0 0.0
    %193 = vmatprep.subr.mxu0 0.0
    %194 = vmatpush1.xpose.msra.mxu0 0.0
    %195 = vmatprep.subr.mxu0 0.0
    %196 = vmatpush1.xpose.msra.mxu0 0.0
    %197 = vmatprep.subr.mxu0 0.0
    %198 = vmatpush1.xpose.msra.mxu0 0.0
    %199 = vmatprep.subr.mxu0 0.0
    %200 = vmatpush1.xpose.msra.mxu0 0.0
    %201 = vmatprep.subr.mxu0 0.0
    %202 = vmatpush1.xpose.msra.mxu0 0.0
    %203 = vmatprep.subr.mxu0 0.0
    %204 = vmatpush1.xpose.msra.mxu0 0.0
    %205 = vmatprep.subr.mxu0 0.0
    %206 = vmatpush1.xpose.msra.mxu0 0.0
    %207 = vmatprep.subr.mxu0 0.0
    %208 = vmatpush1.xpose.msra.mxu0 0.0
    %209 = vmatprep.subr.mxu0 0.0
    %210 = vmatpush1.xpose.msra.mxu0 0.0
    %211 = vmatprep.mubr.f32.mxu0 0.0
    %212 = vmatmul.mubr.f32.gmra.mrb[0].mxu0 %v142
    %v213 = vpop.f32.mrb[0].mxu0
    %v214 = vadd.f32 0.0, %v213
    %v215 = vpop.f32.mrb[0].mxu0
    %216 = vdwg.mxu0
    %v218 = vsel %vm64, %v58, 0
    %v221 = vsel %vm64, %v62, 0
    %223 = vmatprep.subr.mxu0 0.0
    %224 = vmatpush1.xpose.msra.mxu0 %v221
    %225 = vmatprep.subr.mxu0 0.0
    %226 = vmatpush1.xpose.msra.mxu0 0.0
    %227 = vmatprep.subr.mxu0 0.0
    %228 = vmatpush1.xpose.msra.mxu0 0.0
    %229 = vmatprep.subr.mxu0 0.0
    %230 = vmatpush1.xpose.msra.mxu0 0.0
    %231 = vmatprep.subr.mxu0 0.0
    %232 = vmatpush1.xpose.msra.mxu0 0.0
    %233 = vmatprep.subr.mxu0 0.0
    %234 = vmatpush1.xpose.msra.mxu0 0.0
    %235 = vmatprep.subr.mxu0 0.0
    %236 = vmatpush1.xpose.msra.mxu0 0.0
    %237 = vmatprep.subr.mxu0 0.0
    %238 = vmatpush1.xpose.msra.mxu0 0.0
    %239 = vmatprep.subr.mxu0 0.0
    %240 = vmatpush1.xpose.msra.mxu0 0.0
    %241 = vmatprep.subr.mxu0 0.0
    %242 = vmatpush1.xpose.msra.mxu0 0.0
    %243 = vmatprep.subr.mxu0 0.0
    %244 = vmatpush1.xpose.msra.mxu0 0.0
    %245 = vmatprep.subr.mxu0 0.0
    %246 = vmatpush1.xpose.msra.mxu0 0.0
    %247 = vmatprep.subr.mxu0 0.0
    %248 = vmatpush1.xpose.msra.mxu0 0.0
    %249 = vmatprep.subr.mxu0 0.0
    %250 = vmatpush1.xpose.msra.mxu0 0.0
    %251 = vmatprep.subr.mxu0 0.0
    %252 = vmatpush1.xpose.msra.mxu0 0.0
    %253 = vmatprep.subr.mxu0 0.0
    %254 = vmatpush1.xpose.msra.mxu0 0.0
    %255 = vmatprep.subr.mxu0 0.0
    %256 = vmatpush1.xpose.msra.mxu0 0.0
    %257 = vmatprep.subr.mxu0 0.0
    %258 = vmatpush1.xpose.msra.mxu0 0.0
    %259 = vmatprep.subr.mxu0 0.0
    %260 = vmatpush1.xpose.msra.mxu0 0.0
    %261 = vmatprep.subr.mxu0 0.0
    %262 = vmatpush1.xpose.msra.mxu0 0.0
    %263 = vmatprep.subr.mxu0 0.0
    %264 = vmatpush1.xpose.msra.mxu0 0.0
    %265 = vmatprep.subr.mxu0 0.0
    %266 = vmatpush1.xpose.msra.mxu0 0.0
    %267 = vmatprep.subr.mxu0 0.0
    %268 = vmatpush1.xpose.msra.mxu0 0.0
    %269 = vmatprep.subr.mxu0 0.0
    %270 = vmatpush1.xpose.msra.mxu0 0.0
    %271 = vmatprep.subr.mxu0 0.0
    %272 = vmatpush1.xpose.msra.mxu0 0.0
    %273 = vmatprep.subr.mxu0 0.0
    %274 = vmatpush1.xpose.msra.mxu0 0.0
    %275 = vmatprep.subr.mxu0 0.0
    %276 = vmatpush1.xpose.msra.mxu0 0.0
    %277 = vmatprep.subr.mxu0 0.0
    %278 = vmatpush1.xpose.msra.mxu0 0.0
    %279 = vmatprep.subr.mxu0 0.0
    %280 = vmatpush1.xpose.msra.mxu0 0.0
    %281 = vmatprep.subr.mxu0 0.0
    %282 = vmatpush1.xpose.msra.mxu0 0.0
    %283 = vmatprep.subr.mxu0 0.0
    %284 = vmatpush1.xpose.msra.mxu0 0.0
    %285 = vmatprep.subr.mxu0 0.0
    %286 = vmatpush1.xpose.msra.mxu0 0.0
    %287 = vmatprep.mubr.f32.mxu0 0.0
    %288 = vmatmul.mubr.f32.gmra.mrb[0].mxu0 %v218
    %v289 = vpop.f32.mrb[0].mxu0
    %v290 = vadd.f32 0.0, %v289
    %v291 = vpop.f32.mrb[0].mxu0
    %292 = vdwg.mxu0
    %v294 = vsel %vm64, %v59, 0
    %v297 = vsel %vm64, %v63, 0
    %299 = vmatprep.subr.mxu0 0.0
    %300 = vmatpush1.xpose.msra.mxu0 %v297
    %301 = vmatprep.subr.mxu0 0.0
    %302 = vmatpush1.xpose.msra.mxu0 0.0
    %303 = vmatprep.subr.mxu0 0.0
    %304 = vmatpush1.xpose.msra.mxu0 0.0
    %305 = vmatprep.subr.mxu0 0.0
    %306 = vmatpush1.xpose.msra.mxu0 0.0
    %307 = vmatprep.subr.mxu0 0.0
    %308 = vmatpush1.xpose.msra.mxu0 0.0
    %309 = vmatprep.subr.mxu0 0.0
    %310 = vmatpush1.xpose.msra.mxu0 0.0
    %311 = vmatprep.subr.mxu0 0.0
    %312 = vmatpush1.xpose.msra.mxu0 0.0
    %313 = vmatprep.subr.mxu0 0.0
    %314 = vmatpush1.xpose.msra.mxu0 0.0
    %315 = vmatprep.subr.mxu0 0.0
    %316 = vmatpush1.xpose.msra.mxu0 0.0
    %317 = vmatprep.subr.mxu0 0.0
    %318 = vmatpush1.xpose.msra.mxu0 0.0
    %319 = vmatprep.subr.mxu0 0.0
    %320 = vmatpush1.xpose.msra.mxu0 0.0
    %321 = vmatprep.subr.mxu0 0.0
    %322 = vmatpush1.xpose.msra.mxu0 0.0
    %323 = vmatprep.subr.mxu0 0.0
    %324 = vmatpush1.xpose.msra.mxu0 0.0
    %325 = vmatprep.subr.mxu0 0.0
    %326 = vmatpush1.xpose.msra.mxu0 0.0
    %327 = vmatprep.subr.mxu0 0.0
    %328 = vmatpush1.xpose.msra.mxu0 0.0
    %329 = vmatprep.subr.mxu0 0.0
    %330 = vmatpush1.xpose.msra.mxu0 0.0
    %331 = vmatprep.subr.mxu0 0.0
    %332 = vmatpush1.xpose.msra.mxu0 0.0
    %333 = vmatprep.subr.mxu0 0.0
    %334 = vmatpush1.xpose.msra.mxu0 0.0
    %335 = vmatprep.subr.mxu0 0.0
    %336 = vmatpush1.xpose.msra.mxu0 0.0
    %337 = vmatprep.subr.mxu0 0.0
    %338 = vmatpush1.xpose.msra.mxu0 0.0
    %339 = vmatprep.subr.mxu0 0.0
    %340 = vmatpush1.xpose.msra.mxu0 0.0
    %341 = vmatprep.subr.mxu0 0.0
    %342 = vmatpush1.xpose.msra.mxu0 0.0
    %343 = vmatprep.subr.mxu0 0.0
    %344 = vmatpush1.xpose.msra.mxu0 0.0
    %345 = vmatprep.subr.mxu0 0.0
    %346 = vmatpush1.xpose.msra.mxu0 0.0
    %347 = vmatprep.subr.mxu0 0.0
    %348 = vmatpush1.xpose.msra.mxu0 0.0
    %349 = vmatprep.subr.mxu0 0.0
    %350 = vmatpush1.xpose.msra.mxu0 0.0
    %351 = vmatprep.subr.mxu0 0.0
    %352 = vmatpush1.xpose.msra.mxu0 0.0
    %353 = vmatprep.subr.mxu0 0.0
    %354 = vmatpush1.xpose.msra.mxu0 0.0
    %355 = vmatprep.subr.mxu0 0.0
    %356 = vmatpush1.xpose.msra.mxu0 0.0
    %357 = vmatprep.subr.mxu0 0.0
    %358 = vmatpush1.xpose.msra.mxu0 0.0
    %359 = vmatprep.subr.mxu0 0.0
    %360 = vmatpush1.xpose.msra.mxu0 0.0
    %361 = vmatprep.subr.mxu0 0.0
    %362 = vmatpush1.xpose.msra.mxu0 0.0
    %363 = vmatprep.mubr.f32.mxu0 0.0
    %364 = vmatmul.mubr.f32.gmra.mrb[0].mxu0 %v294
    %v365 = vpop.f32.mrb[0].mxu0
    %v366 = vadd.f32 0.0, %v365
    %v367 = vpop.f32.mrb[0].mxu0
    %368 = vdwg.mxu0
    %v369 = vmul.f32 %v138, 0.25
    %v370 = vmul.f32 %v214, 0.25
    %v371 = vmul.f32 %v290, 0.25
    %v372 = vmul.f32 %v366, 0.25
    %vm373 = vcmask 64512
    %v374 = vsel %vm373, %v369, -inf
    %375 = vmax.xlane.f32.xlu0 %v374
    %v376 = vpop.xlane.xlu0 %375
    %v377 = vsel %vm373, %v370, -inf
    %378 = vmax.xlane.f32.xlu0 %v377
    %v379 = vpop.xlane.xlu0 %378
    %v380 = vsel %vm373, %v371, -inf
    %381 = vmax.xlane.f32.xlu0 %v380
    %v382 = vpop.xlane.xlu0 %381
    %v383 = vsel %vm373, %v372, -inf
    %384 = vmax.xlane.f32.xlu0 %v383
    %v385 = vpop.xlane.xlu0 %384
    %v386 = vsub.f32 %v369, %v376
    %v387 = vsub.f32 %v370, %v379
    %v388 = vsub.f32 %v371, %v382
    %v389 = vsub.f32 %v372, %v385
    %v390 = vmul.f32 %v386, 1.442695
    %v391 = vpow.pop %v390
    %v392 = vmul.f32 %v387, 1.442695
    %v393 = vpow.pop %v392
    %v394 = vmul.f32 %v388, 1.442695
    %v395 = vpow.pop %v394
    %v396 = vmul.f32 %v389, 1.442695
    %v397 = vpow.pop %v396
    %v398 = vsel %vm373, %v391, 0.0
    %399 = vadd.xlane.f32.xlu0 %v398
    %v400 = vpop.xlane.xlu0 %399
    %v401 = vsel %vm373, %v393, 0.0
    %402 = vadd.xlane.f32.xlu0 %v401
    %v403 = vpop.xlane.xlu0 %402
    %v404 = vsel %vm373, %v395, 0.0
    %405 = vadd.xlane.f32.xlu0 %v404
    %v406 = vpop.xlane.xlu0 %405
    %v407 = vsel %vm373, %v397, 0.0
    %408 = vadd.xlane.f32.xlu0 %v407
    %v409 = vpop.xlane.xlu0 %408
    %v410 = vld [vmem:[#allocation7] sm:$0xff]
    %v411 = vld [vmem:[#allocation7 + $0x8] sm:$0xff]
    %v412 = vld [vmem:[#allocation7 + $0x10] sm:$0xff]
    %v413 = vld [vmem:[#allocation7 + $0x18] sm:$0xff]
    %vm414 = vcmp.ge.u32.totalorder %v410, 2147483648
    %vm415 = vcmp.ge.u32.totalorder %v411, 2147483648
    %vm416 = vcmp.ge.u32.totalorder %v412, 2147483648
    %vm417 = vcmp.ge.u32.totalorder %v413, 2147483648
    %v418 = vrcp.pop %v400
    %v419 = vrcp.pop %v403
    %v420 = vrcp.pop %v406
    %v421 = vrcp.pop %v409
    %v422 = vmul.f32 %v418, 2.0
    %v423 = vmul.f32 %v419, 2.0
    %v424 = vmul.f32 %v420, 2.0
    %v425 = vmul.f32 %v421, 2.0
    %v426 = vmul.f32 %v391, %v422
    %v427 = vmul.f32 %v393, %v423
    %v428 = vmul.f32 %v395, %v424
    %v429 = vmul.f32 %v397, %v425
    %v430 = vsel %vm414, %v426, 0.0
    %v431 = vsel %vm415, %v427, 0.0
    %v432 = vsel %vm416, %v428, 0.0
    %v433 = vsel %vm417, %v429, 0.0
    %v435 = vsel %vm373, %v430, 0
    %437 = vmatprep.subr.mxu0 0.0
    %438 = vmatpush1.msra.mxu0 %v60
    %439 = vmatprep.subr.mxu0 0.0
    %440 = vmatpush1.msra.mxu0 0.0
    %441 = vmatprep.subr.mxu0 0.0
    %442 = vmatpush1.msra.mxu0 0.0
    %443 = vmatprep.subr.mxu0 0.0
    %444 = vmatpush1.msra.mxu0 0.0
    %445 = vmatprep.subr.mxu0 0.0
    %446 = vmatpush1.msra.mxu0 0.0
    %447 = vmatprep.subr.mxu0 0.0
    %448 = vmatpush1.msra.mxu0 0.0
    %449 = vmatprep.subr.mxu0 0.0
    %450 = vmatpush1.msra.mxu0 0.0
    %451 = vmatprep.subr.mxu0 0.0
    %452 = vmatpush1.msra.mxu0 0.0
    %453 = vmatprep.subr.mxu0 0.0
    %454 = vmatpush1.msra.mxu0 0.0
    %455 = vmatprep.subr.mxu0 0.0
    %456 = vmatpush1.msra.mxu0 0.0
    %457 = vmatprep.subr.mxu0 0.0
    %458 = vmatpush1.msra.mxu0 0.0
    %459 = vmatprep.subr.mxu0 0.0
    %460 = vmatpush1.msra.mxu0 0.0
    %461 = vmatprep.subr.mxu0 0.0
    %462 = vmatpush1.msra.mxu0 0.0
    %463 = vmatprep.subr.mxu0 0.0
    %464 = vmatpush1.msra.mxu0 0.0
    %465 = vmatprep.subr.mxu0 0.0
    %466 = vmatpush1.msra.mxu0 0.0
    %467 = vmatprep.subr.mxu0 0.0
    %468 = vmatpush1.msra.mxu0 0.0
    %469 = vmatprep.subr.mxu0 0.0
    %470 = vmatpush1.msra.mxu0 0.0
    %471 = vmatprep.subr.mxu0 0.0
    %472 = vmatpush1.msra.mxu0 0.0
    %473 = vmatprep.subr.mxu0 0.0
    %474 = vmatpush1.msra.mxu0 0.0
    %475 = vmatprep.subr.mxu0 0.0
    %476 = vmatpush1.msra.mxu0 0.0
    %477 = vmatprep.subr.mxu0 0.0
    %478 = vmatpush1.msra.mxu0 0.0
    %479 = vmatprep.subr.mxu0 0.0
    %480 = vmatpush1.msra.mxu0 0.0
    %481 = vmatprep.subr.mxu0 0.0
    %482 = vmatpush1.msra.mxu0 0.0
    %483 = vmatprep.subr.mxu0 0.0
    %484 = vmatpush1.msra.mxu0 0.0
    %485 = vmatprep.subr.mxu0 0.0
    %486 = vmatpush1.msra.mxu0 0.0
    %487 = vmatprep.subr.mxu0 0.0
    %488 = vmatpush1.msra.mxu0 0.0
    %489 = vmatprep.subr.mxu0 0.0
    %490 = vmatpush1.msra.mxu0 0.0
    %491 = vmatprep.subr.mxu0 0.0
    %492 = vmatpush1.msra.mxu0 0.0
    %493 = vmatprep.subr.mxu0 0.0
    %494 = vmatpush1.msra.mxu0 0.0
    %495 = vmatprep.subr.mxu0 0.0
    %496 = vmatpush1.msra.mxu0 0.0
    %497 = vmatprep.subr.mxu0 0.0
    %498 = vmatpush1.msra.mxu0 0.0
    %499 = vmatprep.subr.mxu0 0.0
    %500 = vmatpush1.msra.mxu0 0.0
    %501 = vmatprep.mubr.f32.mxu0 0.0
    %502 = vmatmul.mubr.f32.gmra.mrb[0].mxu0 %v435
    %v503 = vpop.f32.mrb[0].mxu0
    %v504 = vadd.f32 0.0, %v503
    %v505 = vpop.f32.mrb[0].mxu0
    %506 = vdwg.mxu0
    %v508 = vsel %vm373, %v431, 0
    %510 = vmatprep.subr.mxu0 0.0
    %511 = vmatpush1.msra.mxu0 %v61
    %512 = vmatprep.subr.mxu0 0.0
    %513 = vmatpush1.msra.mxu0 0.0
    %514 = vmatprep.subr.mxu0 0.0
    %515 = vmatpush1.msra.mxu0 0.0
    %516 = vmatprep.subr.mxu0 0.0
    %517 = vmatpush1.msra.mxu0 0.0
    %518 = vmatprep.subr.mxu0 0.0
    %519 = vmatpush1.msra.mxu0 0.0
    %520 = vmatprep.subr.mxu0 0.0
    %521 = vmatpush1.msra.mxu0 0.0
    %522 = vmatprep.subr.mxu0 0.0
    %523 = vmatpush1.msra.mxu0 0.0
    %524 = vmatprep.subr.mxu0 0.0
    %525 = vmatpush1.msra.mxu0 0.0
    %526 = vmatprep.subr.mxu0 0.0
    %527 = vmatpush1.msra.mxu0 0.0
    %528 = vmatprep.subr.mxu0 0.0
    %529 = vmatpush1.msra.mxu0 0.0
    %530 = vmatprep.subr.mxu0 0.0
    %531 = vmatpush1.msra.mxu0 0.0
    %532 = vmatprep.subr.mxu0 0.0
    %533 = vmatpush1.msra.mxu0 0.0
    %534 = vmatprep.subr.mxu0 0.0
    %535 = vmatpush1.msra.mxu0 0.0
    %536 = vmatprep.subr.mxu0 0.0
    %537 = vmatpush1.msra.mxu0 0.0
    %538 = vmatprep.subr.mxu0 0.0
    %539 = vmatpush1.msra.mxu0 0.0
    %540 = vmatprep.subr.mxu0 0.0
    %541 = vmatpush1.msra.mxu0 0.0
    %542 = vmatprep.subr.mxu0 0.0
    %543 = vmatpush1.msra.mxu0 0.0
    %544 = vmatprep.subr.mxu0 0.0
    %545 = vmatpush1.msra.mxu0 0.0
    %546 = vmatprep.subr.mxu0 0.0
    %547 = vmatpush1.msra.mxu0 0.0
    %548 = vmatprep.subr.mxu0 0.0
    %549 = vmatpush1.msra.mxu0 0.0
    %550 = vmatprep.subr.mxu0 0.0
    %551 = vmatpush1.msra.mxu0 0.0
    %552 = vmatprep.subr.mxu0 0.0
    %553 = vmatpush1.msra.mxu0 0.0
    %554 = vmatprep.subr.mxu0 0.0
    %555 = vmatpush1.msra.mxu0 0.0
    %556 = vmatprep.subr.mxu0 0.0
    %557 = vmatpush1.msra.mxu0 0.0
    %558 = vmatprep.subr.mxu0 0.0
    %559 = vmatpush1.msra.mxu0 0.0
    %560 = vmatprep.subr.mxu0 0.0
    %561 = vmatpush1.msra.mxu0 0.0
    %562 = vmatprep.subr.mxu0 0.0
    %563 = vmatpush1.msra.mxu0 0.0
    %564 = vmatprep.subr.mxu0 0.0
    %565 = vmatpush1.msra.mxu0 0.0
    %566 = vmatprep.subr.mxu0 0.0
    %567 = vmatpush1.msra.mxu0 0.0
    %568 = vmatprep.subr.mxu0 0.0
    %569 = vmatpush1.msra.mxu0 0.0
    %570 = vmatprep.subr.mxu0 0.0
    %571 = vmatpush1.msra.mxu0 0.0
    %572 = vmatprep.subr.mxu0 0.0
    %573 = vmatpush1.msra.mxu0 0.0
    %574 = vmatprep.mubr.f32.mxu0 0.0
    %575 = vmatmul.mubr.f32.gmra.mrb[0].mxu0 %v508
    %v576 = vpop.f32.mrb[0].mxu0
    %v577 = vadd.f32 0.0, %v576
    %v578 = vpop.f32.mrb[0].mxu0
    %579 = vdwg.mxu0
    %v581 = vsel %vm373, %v432, 0
    %583 = vmatprep.subr.mxu0 0.0
    %584 = vmatpush1.msra.mxu0 %v62
    %585 = vmatprep.subr.mxu0 0.0
    %586 = vmatpush1.msra.mxu0 0.0
    %587 = vmatprep.subr.mxu0 0.0
    %588 = vmatpush1.msra.mxu0 0.0
    %589 = vmatprep.subr.mxu0 0.0
    %590 = vmatpush1.msra.mxu0 0.0
    %591 = vmatprep.subr.mxu0 0.0
    %592 = vmatpush1.msra.mxu0 0.0
    %593 = vmatprep.subr.mxu0 0.0
    %594 = vmatpush1.msra.mxu0 0.0
    %595 = vmatprep.subr.mxu0 0.0
    %596 = vmatpush1.msra.mxu0 0.0
    %597 = vmatprep.subr.mxu0 0.0
    %598 = vmatpush1.msra.mxu0 0.0
    %599 = vmatprep.subr.mxu0 0.0
    %600 = vmatpush1.msra.mxu0 0.0
    %601 = vmatprep.subr.mxu0 0.0
    %602 = vmatpush1.msra.mxu0 0.0
    %603 = vmatprep.subr.mxu0 0.0
    %604 = vmatpush1.msra.mxu0 0.0
    %605 = vmatprep.subr.mxu0 0.0
    %606 = vmatpush1.msra.mxu0 0.0
    %607 = vmatprep.subr.mxu0 0.0
    %608 = vmatpush1.msra.mxu0 0.0
    %609 = vmatprep.subr.mxu0 0.0
    %610 = vmatpush1.msra.mxu0 0.0
    %611 = vmatprep.subr.mxu0 0.0
    %612 = vmatpush1.msra.mxu0 0.0
    %613 = vmatprep.subr.mxu0 0.0
    %614 = vmatpush1.msra.mxu0 0.0
    %615 = vmatprep.subr.mxu0 0.0
    %616 = vmatpush1.msra.mxu0 0.0
    %617 = vmatprep.subr.mxu0 0.0
    %618 = vmatpush1.msra.mxu0 0.0
    %619 = vmatprep.subr.mxu0 0.0
    %620 = vmatpush1.msra.mxu0 0.0
    %621 = vmatprep.subr.mxu0 0.0
    %622 = vmatpush1.msra.mxu0 0.0
    %623 = vmatprep.subr.mxu0 0.0
    %624 = vmatpush1.msra.mxu0 0.0
    %625 = vmatprep.subr.mxu0 0.0
    %626 = vmatpush1.msra.mxu0 0.0
    %627 = vmatprep.subr.mxu0 0.0
    %628 = vmatpush1.msra.mxu0 0.0
    %629 = vmatprep.subr.mxu0 0.0
    %630 = vmatpush1.msra.mxu0 0.0
    %631 = vmatprep.subr.mxu0 0.0
    %632 = vmatpush1.msra.mxu0 0.0
    %633 = vmatprep.subr.mxu0 0.0
    %634 = vmatpush1.msra.mxu0 0.0
    %635 = vmatprep.subr.mxu0 0.0
    %636 = vmatpush1.msra.mxu0 0.0
    %637 = vmatprep.subr.mxu0 0.0
    %638 = vmatpush1.msra.mxu0 0.0
    %639 = vmatprep.subr.mxu0 0.0
    %640 = vmatpush1.msra.mxu0 0.0
    %641 = vmatprep.subr.mxu0 0.0
    %642 = vmatpush1.msra.mxu0 0.0
    %643 = vmatprep.subr.mxu0 0.0
    %644 = vmatpush1.msra.mxu0 0.0
    %645 = vmatprep.subr.mxu0 0.0
    %646 = vmatpush1.msra.mxu0 0.0
    %647 = vmatprep.mubr.f32.mxu0 0.0
    %648 = vmatmul.mubr.f32.gmra.mrb[0].mxu0 %v581
    %v649 = vpop.f32.mrb[0].mxu0
    %v650 = vadd.f32 0.0, %v649
    %v651 = vpop.f32.mrb[0].mxu0
    %652 = vdwg.mxu0
    %v654 = vsel %vm373, %v433, 0
    %656 = vmatprep.subr.mxu0 0.0
    %657 = vmatpush1.msra.mxu0 %v63
    %658 = vmatprep.subr.mxu0 0.0
    %659 = vmatpush1.msra.mxu0 0.0
    %660 = vmatprep.subr.mxu0 0.0
    %661 = vmatpush1.msra.mxu0 0.0
    %662 = vmatprep.subr.mxu0 0.0
    %663 = vmatpush1.msra.mxu0 0.0
    %664 = vmatprep.subr.mxu0 0.0
    %665 = vmatpush1.msra.mxu0 0.0
    %666 = vmatprep.subr.mxu0 0.0
    %667 = vmatpush1.msra.mxu0 0.0
    %668 = vmatprep.subr.mxu0 0.0
    %669 = vmatpush1.msra.mxu0 0.0
    %670 = vmatprep.subr.mxu0 0.0
    %671 = vmatpush1.msra.mxu0 0.0
    %672 = vmatprep.subr.mxu0 0.0
    %673 = vmatpush1.msra.mxu0 0.0
    %674 = vmatprep.subr.mxu0 0.0
    %675 = vmatpush1.msra.mxu0 0.0
    %676 = vmatprep.subr.mxu0 0.0
    %677 = vmatpush1.msra.mxu0 0.0
    %678 = vmatprep.subr.mxu0 0.0
    %679 = vmatpush1.msra.mxu0 0.0
    %680 = vmatprep.subr.mxu0 0.0
    %681 = vmatpush1.msra.mxu0 0.0
    %682 = vmatprep.subr.mxu0 0.0
    %683 = vmatpush1.msra.mxu0 0.0
    %684 = vmatprep.subr.mxu0 0.0
    %685 = vmatpush1.msra.mxu0 0.0
    %686 = vmatprep.subr.mxu0 0.0
    %687 = vmatpush1.msra.mxu0 0.0
    %688 = vmatprep.subr.mxu0 0.0
    %689 = vmatpush1.msra.mxu0 0.0
    %690 = vmatprep.subr.mxu0 0.0
    %691 = vmatpush1.msra.mxu0 0.0
    %692 = vmatprep.subr.mxu0 0.0
    %693 = vmatpush1.msra.mxu0 0.0
    %694 = vmatprep.subr.mxu0 0.0
    %695 = vmatpush1.msra.mxu0 0.0
    %696 = vmatprep.subr.mxu0 0.0
    %697 = vmatpush1.msra.mxu0 0.0
    %698 = vmatprep.subr.mxu0 0.0
    %699 = vmatpush1.msra.mxu0 0.0
    %700 = vmatprep.subr.mxu0 0.0
    %701 = vmatpush1.msra.mxu0 0.0
    %702 = vmatprep.subr.mxu0 0.0
    %703 = vmatpush1.msra.mxu0 0.0
    %704 = vmatprep.subr.mxu0 0.0
    %705 = vmatpush1.msra.mxu0 0.0
    %706 = vmatprep.subr.mxu0 0.0
    %707 = vmatpush1.msra.mxu0 0.0
    %708 = vmatprep.subr.mxu0 0.0
    %709 = vmatpush1.msra.mxu0 0.0
    %710 = vmatprep.subr.mxu0 0.0
    %711 = vmatpush1.msra.mxu0 0.0
    %712 = vmatprep.subr.mxu0 0.0
    %713 = vmatpush1.msra.mxu0 0.0
    %714 = vmatprep.subr.mxu0 0.0
    %715 = vmatpush1.msra.mxu0 0.0
    %716 = vmatprep.subr.mxu0 0.0
    %717 = vmatpush1.msra.mxu0 0.0
    %718 = vmatprep.subr.mxu0 0.0
    %719 = vmatpush1.msra.mxu0 0.0
    %720 = vmatprep.mubr.f32.mxu0 0.0
    %721 = vmatmul.mubr.f32.gmra.mrb[0].mxu0 %v654
    %v722 = vpop.f32.mrb[0].mxu0
    %v723 = vadd.f32 0.0, %v722
    %v724 = vpop.f32.mrb[0].mxu0
    %725 = vdwg.mxu0
    %726 = vst.msk [vmem:[#allocation8] sm:$0xff] %vm64, %v504
    %727 = vst.msk [vmem:[#allocation8 + $0x8] sm:$0xff] %vm64, %v577
    %728 = vst.msk [vmem:[#allocation8 + $0x10] sm:$0xff] %vm64, %v650
    %729 = vst.msk [vmem:[#allocation8 + $0x18] sm:$0xff] %vm64, %v723
    // Predicated region
    $region26: #{tpu_custom_call.1} parent=1 // pred_check
      _
    $region27: #{tpu_custom_call.1} parent=1 // pred_check_branch
      %731 = sbr.rel (0) target = $region29
    $region28: #{tpu_custom_call.1} parent=1 // pred_region
      %s733 = ssub.s32 512, 512
      %734 = vsyncadd [#allocation4], %s733
      %s735 = sshll.u32 [#allocation8], 4
      %s736 = int_to_ptr.vmem [resolvable:$true] %s735
      %741 = dma.vmem_to_hbm [thread:$0]  %s736, 512, %s3, [#allocation4], 128, 128, 8
    $region29: #{tpu_custom_call.1} parent=1 // pred_fallthru
      _
    // Predicated region
    $region30: #{tpu_custom_call.1} parent=1 // pred_check
      _
    $region31: #{tpu_custom_call.1} parent=1 // pred_check_branch
      %743 = sbr.rel (0) target = $region33
    $region32: #{tpu_custom_call.1} parent=1 // pred_region
      %744 = dma.done [#allocation4], 512
    $region33: #{tpu_custom_call.1} parent=1 // pred_fallthru
      _
    %745 = vsyncpa [#allocation3], 1
    %746 = vsyncpa [#allocation6], 1
    %747 = vsyncpa [#allocation4], 1

</llo_original>
